<compile_context>
chip_gen: v7x
topology: tpu7x:2x2x1
jax: 0.10.0
libtpu: 0.0.40
codegen_flags: <defaults>
</compile_context>

<pallas_src>
import functools

import jax
import jax.numpy as jnp
from jax.experimental import pallas as pl
from jax.experimental.pallas import tpu as pltpu

MATMUL_DTYPE = jnp.bfloat16  # MXU operand dtype (f32 accumulation)


def _round_up(x, m):
    return (x + m - 1) // m * m


@functools.lru_cache(maxsize=1)
def _vmem_limit_bytes():
    """Per-generation VMEM limit: ~3/4 of physical, capped at 96 MiB."""
    try:
        cap = pltpu.get_tpu_info().vmem_capacity_bytes
    except Exception:
        cap = 64 * 1024 * 1024  # conservative fallback (v7x-sized)
    return int(min(cap * 3 // 4, 96 * 1024 * 1024))


def _pick_tile(total, align, max_tile):
    """Largest tile <= max_tile dividing `total` (aligned), else `total`."""
    if total <= max_tile:
        return total
    t = (max_tile // align) * align
    while t >= align:
        if total % t == 0:
            return t
        t -= align
    return total


# ----------------------------------------------------------------------------
# 'cls' pooling path: encoder dense (token 0 only) + ReLU + Linear head.
# Grid: independent D tiles ("parallel"); head partials are summed (+ bias) in
# the wrapper, so there is no resident accumulator and v7x can use both TCs.
# ----------------------------------------------------------------------------
def _cls_kernel(x_ref, w_enc_ref, b_enc_ref, w_row_ref, emb_ref, part_ref):
    # x_ref:     (B, d_emb)  bf16 token-0 embeddings (mask applied, pre-cast)
    # w_enc_ref: (d_emb, tn) bf16 encoder weight tile
    # b_enc_ref: (1, tn)     f32 encoder bias tile
    # w_row_ref: (1, tn)     f32 head weight (w_lin[:, 0]) tile, lane-dense
    # emb_ref:   (B, tn)     f32 pooled-embedding tile (output)
    # part_ref:  (1, B, 1)   f32 per-tile head partial (output)
    h = jnp.dot(x_ref[...], w_enc_ref[...],
                preferred_element_type=jnp.float32)              # MXU, f32 acc
    h = jnp.maximum(h + b_enc_ref[...], 0.0)                     # f32 VPU
    emb_ref[...] = h
    # Dropout is identity at inference.  Linear(D, 1) as a VPU/XLU reduce.
    part = jnp.sum(h * w_row_ref[...], axis=-1, keepdims=True)   # (B, 1)
    part_ref[...] = part[None]                                   # (1, B, 1)


def _t5full_cls(x0_bf16, w_enc_bf16, b_enc, w_lin, b_lin):
    B, d_emb = x0_bf16.shape
    D, C = w_lin.shape
    assert C == 1  # TODO(synk): C > 1 head would need a lane-padded MXU path.

    tn = _pick_tile(D, align=256, max_tile=4096)   # tn = D at typical sizes
    n_tiles = D // tn
    w_row = w_lin.T.reshape(1, D).astype(jnp.float32)

    emb, partials = pl.pallas_call(
        _cls_kernel,
        out_shape=(
            jax.ShapeDtypeStruct((B, D), jnp.float32),        # input_embedding
            jax.ShapeDtypeStruct((n_tiles, B, 1), jnp.float32),  # head partials
        ),
        grid=(n_tiles,),
        in_specs=[
            pl.BlockSpec((B, d_emb), lambda j: (0, 0)),
            pl.BlockSpec((d_emb, tn), lambda j: (0, j)),
            pl.BlockSpec((1, tn), lambda j: (0, j)),
            pl.BlockSpec((1, tn), lambda j: (0, j)),
        ],
        out_specs=(
            pl.BlockSpec((B, tn), lambda j: (0, j)),
            pl.BlockSpec((1, B, 1), lambda j: (j, 0, 0)),
        ),
        compiler_params=pltpu.CompilerParams(
            dimension_semantics=("parallel",),
            vmem_limit_bytes=_vmem_limit_bytes(),
        ),
    )(x0_bf16, w_enc_bf16, b_enc, w_row)

    out = partials.sum(axis=0) + b_lin.reshape(1, C).astype(jnp.float32)
    return emb, out


# ----------------------------------------------------------------------------
# 'mean' pooling path: fused embedding gather (masked one-hot x table on the
# MXU) + encoder dense + ReLU per sequence tile, elementwise-accumulated into a
# (ts, D) f32 scratch; finalize (sublane reduce, 1/S scale, Linear head) runs
# once per batch element.  Grid: (B, S_pad/ts) with ("parallel", "arbitrary").
# ----------------------------------------------------------------------------
def _make_mean_kernel(seq_len, s_pad, ts, spb, vocab):
    inv_s = 1.0 / float(seq_len)          # static -> free scale
    needs_seq_mask = (s_pad != seq_len)   # zero out padded rows only if padded

    def kernel(ids_ref, mask_ref, table_ref, w_enc_ref, b_enc_ref,
               w_row_ref, b_lin_ref, emb_out_ref, out_ref, acc_ref):
        # ids_ref:     (ts, 1)      int32 token ids for this (batch, seq) tile
        # mask_ref:    (ts, 1)      f32 attention mask (pads are 0)
        # table_ref:   (vocab, de)  bf16 embedding table, resident
        # w_enc_ref:   (de, D)      bf16 encoder weight, resident
        # b_enc_ref:   (1, D)       f32
        # w_row_ref:   (1, D)       f32 head weight, lane-dense
        # b_lin_ref:   (1, 1)       f32 head bias scalar in SMEM
        # emb_out_ref: (1, 1, D)    pooled embedding (written at finalize)
        # out_ref:     (1, 1, 1)    head output (written at finalize)
        # acc_ref:     (ts, D)      f32 running elementwise sum over seq tiles
        l = pl.program_id(1)

        @pl.when(l == 0)
        def _init():
            acc_ref[...] = jnp.zeros_like(acc_ref)

        # Fused embedding gather: masked one-hot x bf16 table on the MXU.
        # TODO(synk): for a real (32k) vocab this one-hot gather should become a
        # manual DMA row-gather from an HBM-resident table.
        lanes = jax.lax.broadcasted_iota(jnp.int32, (ts, vocab), 1)
        mask_bf = mask_ref[...].astype(MATMUL_DTYPE)                 # (ts, 1)
        onehot = jnp.where(lanes == ids_ref[...], mask_bf, 0)
        onehot = onehot.astype(MATMUL_DTYPE)                         # (ts, vocab)
        x = jnp.dot(onehot, table_ref[...],
                    preferred_element_type=jnp.float32)              # (ts, de)
        h = jnp.dot(x.astype(MATMUL_DTYPE), w_enc_ref[...],
                    preferred_element_type=jnp.float32)              # (ts, D)
        h = jnp.maximum(h + b_enc_ref[...], 0.0)                     # f32 VPU

        if needs_seq_mask:
            # Padded rows would otherwise contribute relu(b_enc); zero them.
            pos = l * ts + jax.lax.broadcasted_iota(jnp.int32, (ts, 1), 0)
            h = jnp.where(pos < seq_len, h, 0.0)

        acc_ref[...] += h                                            # VPU only

        @pl.when(l == spb - 1)
        def _finalize():
            # Unmasked mean over S (matches the PyTorch module; the attention
            # mask only feeds the base model, i.e. the embeddings here).
            mean = jnp.sum(acc_ref[...], axis=0, keepdims=True) * inv_s  # (1, D)
            emb_out_ref[...] = mean.reshape(1, 1, -1)
            head = jnp.sum(mean * w_row_ref[...], axis=-1, keepdims=True)
            out_ref[...] = (head + b_lin_ref[0, 0]).reshape(1, 1, 1)

    return kernel


def _t5full_mean(input_ids, mask_f, table_bf16, w_enc_bf16, b_enc, w_lin, b_lin):
    B, S = input_ids.shape
    vocab, d_emb = table_bf16.shape
    D, C = w_lin.shape
    assert C == 1  # TODO(synk): C > 1 head would need a lane-padded MXU path.

    # Sequence tiling: big tiles (full MXU M), pad S so the tile divides evenly.
    if S <= 256:
        s_pad = _round_up(S, 8)
        ts = s_pad
    else:
        s_pad = _round_up(S, 256)
        ts = 256
    spb = s_pad // ts
    if s_pad != S:
        pad = s_pad - S
        input_ids = jnp.pad(input_ids, ((0, 0), (0, pad)))
        mask_f = jnp.pad(mask_f, ((0, 0), (0, pad)))

    ids_flat = input_ids.reshape(B * s_pad, 1).astype(jnp.int32)
    mask_flat = mask_f.reshape(B * s_pad, 1).astype(jnp.float32)
    w_row = w_lin.T.reshape(1, D).astype(jnp.float32)
    b_lin_s = b_lin.reshape(1, 1).astype(jnp.float32)

    kernel = _make_mean_kernel(S, s_pad, ts, spb, vocab)

    emb_out, out = pl.pallas_call(
        kernel,
        out_shape=(
            jax.ShapeDtypeStruct((B, 1, D), jnp.float32),
            jax.ShapeDtypeStruct((B, 1, 1), jnp.float32),
        ),
        grid=(B, spb),
        in_specs=[
            pl.BlockSpec((ts, 1), lambda b, l: (b * spb + l, 0)),   # ids
            pl.BlockSpec((ts, 1), lambda b, l: (b * spb + l, 0)),   # mask
            pl.BlockSpec((vocab, d_emb), lambda b, l: (0, 0)),      # table (bf16, resident)
            pl.BlockSpec((d_emb, D), lambda b, l: (0, 0)),          # w_enc (bf16, resident)
            pl.BlockSpec((1, D), lambda b, l: (0, 0)),              # b_enc
            pl.BlockSpec((1, D), lambda b, l: (0, 0)),              # w_row
            pl.BlockSpec(memory_space=pltpu.MemorySpace.SMEM),      # head bias scalar
        ],
        out_specs=(
            pl.BlockSpec((1, 1, D), lambda b, l: (b, 0, 0)),
            pl.BlockSpec((1, 1, 1), lambda b, l: (b, 0, 0)),
        ),
        scratch_shapes=[pltpu.VMEM((ts, D), jnp.float32)],
        compiler_params=pltpu.CompilerParams(
            dimension_semantics=("parallel", "arbitrary"),
            vmem_limit_bytes=_vmem_limit_bytes(),
        ),
    )(ids_flat, mask_flat, table_bf16, w_enc_bf16, b_enc, w_row, b_lin_s)
    return emb_out.reshape(B, D), out.reshape(B, C)


# ----------------------------------------------------------------------------
# Full T5Full forward.  The external T5 encoder (base_model) is replaced by a
# deterministic synthetic stand-in: embedding gather (consumes the mask) + a
# dense/ReLU token mixer, fused with the pooling + Linear head.
# ----------------------------------------------------------------------------
def t5full_forward(input_ids, attention_masks, params, pooling="cls"):
    # TODO(synk): a real T5 encoder stack (self-attention) has no clean
    # single-kernel equivalent; a deterministic embedding + dense stand-in
    # produces the "last_hidden_state" instead.
    mask_f = attention_masks.astype(jnp.float32)
    w_enc_bf16 = params["w_enc"].astype(MATMUL_DTYPE)
    b_enc = params["b_enc"].astype(jnp.float32)
    if pooling == "cls":
        # Only token 0 is ever pooled: gather + encode just that token.
        x0 = params["emb_table"][input_ids[:, 0]] * mask_f[:, 0:1]   # (B, d_emb)
        return _t5full_cls(x0.astype(MATMUL_DTYPE), w_enc_bf16, b_enc,
                           params["w_lin"], params["b_lin"])
    elif pooling == "mean":
        # Embedding gather is fused into the kernel (no (B,S,d_emb) round trip).
        table_bf16 = params["emb_table"].astype(MATMUL_DTYPE)
        return _t5full_mean(input_ids, mask_f, table_bf16, w_enc_bf16, b_enc,
                            params["w_lin"], params["b_lin"])
    else:
        raise ValueError(f"unknown pooling: {pooling}")


def _reference_forward(input_ids, attention_masks, params, pooling):
    """Pure-JAX f32 reference for correctness checking."""
    mask_f = attention_masks.astype(jnp.float32)
    emb = params["emb_table"][input_ids] * mask_f[:, :, None]
    h = jnp.maximum(emb @ params["w_enc"] + params["b_enc"], 0.0)
    pooled = h[:, 0, :] if pooling == "cls" else h.mean(axis=1)
    out = pooled @ params["w_lin"] + params["b_lin"]
    return pooled, out


def init_params(key, vocab_size, d_emb, d_model, n_classes):
    k1, k2, k3, k4, k5 = jax.random.split(key, 5)
    return {
        "emb_table": jax.random.normal(k1, (vocab_size, d_emb), jnp.float32) * 0.02,
        "w_enc": jax.random.normal(k2, (d_emb, d_model), jnp.float32) * 0.1,
        "b_enc": jax.random.normal(k3, (1, d_model), jnp.float32) * 0.01,
        # nn.Linear(D_in=d_model, D_out=n_classes): stored as [D_in, D_out]
        "w_lin": jax.random.normal(k4, (d_model, n_classes), jnp.float32) * 0.1,
        "b_lin": jax.random.normal(k5, (n_classes,), jnp.float32) * 0.01,
    }


if __name__ == "__main__":
    key = jax.random.PRNGKey(0)
    VOCAB, D_EMB = 64, 128   # synthetic base-model sizes (lane-dense)
    D_MODEL = 256            # base_model_output_size
    N_CLASSES = 1

    kp, ki = jax.random.split(key)
    params = init_params(kp, VOCAB, D_EMB, D_MODEL, N_CLASSES)
    fwd = jax.jit(t5full_forward, static_argnames=("pooling",))

    ok = True
    # (B, S) = (2, 16): single-step paths; (2, 384): multi-step seq reduction +
    # sequence padding in the mean kernel.
    for (B, S) in ((2, 16), (2, 384)):
        kid = jax.random.fold_in(ki, S)
        input_ids = jax.random.randint(kid, (B, S), 0, VOCAB, dtype=jnp.int32)
        # Batch 0 fully unmasked, batch 1 masked past S//2 (token 0 kept).
        lens = jnp.array([[S], [max(S // 2, 1)]], dtype=jnp.int32)
        attention_masks = (jnp.arange(S)[None, :] < lens).astype(jnp.int32)

        for pooling in ("cls", "mean"):
            emb_p, out_p = fwd(input_ids, attention_masks, params, pooling=pooling)
            jax.block_until_ready((emb_p, out_p))
            assert emb_p.shape == (B, D_MODEL)
            assert out_p.shape == (B, N_CLASSES)

            emb_r, out_r = _reference_forward(input_ids, attention_masks,
                                              params, pooling)
            ok &= bool(jnp.allclose(emb_p, emb_r, rtol=5e-2, atol=5e-3))
            ok &= bool(jnp.allclose(out_p, out_r, rtol=5e-2, atol=5e-3))

    assert ok, "Pallas output mismatch vs pure-JAX reference"
    print("KERNEL_OK")
</pallas_src>

<mosaic_0001>
module attributes {stable_mosaic.version = 11 : i64} {
  func.func @_cls_kernel(%arg0: i32, %arg1: memref<2x128xbf16, #tpu.memory_space<vmem>>, %arg2: memref<128x256xbf16, #tpu.memory_space<vmem>>, %arg3: memref<1x256xf32, #tpu.memory_space<vmem>>, %arg4: memref<1x256xf32, #tpu.memory_space<vmem>>, %arg5: memref<2x256xf32, #tpu.memory_space<vmem>>, %arg6: memref<1x2x1xf32, #tpu.memory_space<vmem>>) attributes {dimension_semantics = [#tpu.dimension_semantics<parallel>], iteration_bounds = array<i64: 1>, scalar_prefetch = 0 : i64, scratch_operands = 0 : i64, tpu.core_type = #tpu.core_type<tc>, window_params = [{pipeline_mode = #tpu.pipeline_mode<synchronous>, transform_indices = @transform_0, window_bounds = array<i64: 2, 128>}, {transform_indices = @transform_1, window_bounds = array<i64: 128, 256>}, {transform_indices = @transform_2, window_bounds = array<i64: 1, 256>}, {transform_indices = @transform_3, window_bounds = array<i64: 1, 256>}, {transform_indices = @transform_4, window_bounds = array<i64: 2, 256>}, {transform_indices = @transform_5, window_bounds = array<i64: 1, 2, 1>}]} {
    %c0 = arith.constant 0 : index
    %c0_0 = arith.constant 0 : index
    %0 = vector.load %arg1[%c0, %c0_0] : memref<2x128xbf16, #tpu.memory_space<vmem>>, vector<2x128xbf16>
    %c0_1 = arith.constant 0 : index
    %c0_2 = arith.constant 0 : index
    %1 = vector.load %arg2[%c0_1, %c0_2] : memref<128x256xbf16, #tpu.memory_space<vmem>>, vector<128x256xbf16>
    %cst = arith.constant dense<0.000000e+00> : vector<2x256xf32>
    %2 = tpu.matmul %0, %1, %cst {dimension_numbers = #tpu.dot_dimension_numbers<[1], [0], [0], [1], [0, 0, 1, 1], [], []>} : vector<2x128xbf16>, vector<128x256xbf16>, vector<2x256xf32> -> vector<2x256xf32>
    %c0_3 = arith.constant 0 : index
    %c0_4 = arith.constant 0 : index
    %3 = vector.load %arg3[%c0_3, %c0_4] : memref<1x256xf32, #tpu.memory_space<vmem>>, vector<1x256xf32>
    %4 = vector.broadcast %3 : vector<1x256xf32> to vector<2x256xf32>
    %5 = arith.addf %2, %4 : vector<2x256xf32>
    %cst_5 = arith.constant 0.000000e+00 : f32
    %6 = vector.broadcast %cst_5 : f32 to vector<2x256xf32>
    %7 = arith.maximumf %5, %6 : vector<2x256xf32>
    %c0_6 = arith.constant 0 : index
    %c0_7 = arith.constant 0 : index
    %8 = vector.load %arg5[%c0_6, %c0_7] : memref<2x256xf32, #tpu.memory_space<vmem>>, vector<2x256xf32>
    tpu.vector_store %arg5[%c0_6, %c0_7], %7 {strides = array<i32>} : memref<2x256xf32, #tpu.memory_space<vmem>>, vector<2x256xf32>,
    %c0_8 = arith.constant 0 : index
    %c0_9 = arith.constant 0 : index
    %9 = vector.load %arg4[%c0_8, %c0_9] : memref<1x256xf32, #tpu.memory_space<vmem>>, vector<1x256xf32>
    %10 = vector.broadcast %9 : vector<1x256xf32> to vector<2x256xf32>
    %11 = arith.mulf %7, %10 : vector<2x256xf32>
    %cst_10 = arith.constant dense<0.000000e+00> : vector<2xf32>
    %12 = vector.multi_reduction <add>, %11, %cst_10 [1] : vector<2x256xf32> to vector<2xf32>
    %13 = vector.shape_cast %12 : vector<2xf32> to vector<2x1xf32>
    %14 = vector.shape_cast %13 : vector<2x1xf32> to vector<1x2x1xf32>
    %c0_11 = arith.constant 0 : index
    %c0_12 = arith.constant 0 : index
    %c0_13 = arith.constant 0 : index
    %15 = vector.load %arg6[%c0_11, %c0_12, %c0_13] : memref<1x2x1xf32, #tpu.memory_space<vmem>>, vector<1x2x1xf32>
    tpu.vector_store %arg6[%c0_11, %c0_12, %c0_13], %14 {strides = array<i32>} : memref<1x2x1xf32, #tpu.memory_space<vmem>>, vector<1x2x1xf32>,
    return
  }
  func.func @transform_0(%arg0: i32) -> (i32, i32) {
    %c0_i32 = arith.constant 0 : i32
    %c0_i32_0 = arith.constant 0 : i32
    %c0_i32_1 = arith.constant 0 : i32
    return %c0_i32, %c0_i32_0 : i32, i32
  }
  func.func @transform_1(%arg0: i32) -> (i32, i32) {
    %c0_i32 = arith.constant 0 : i32
    %c0_i32_0 = arith.constant 0 : i32
    return %c0_i32, %arg0 : i32, i32
  }
  func.func @transform_2(%arg0: i32) -> (i32, i32) {
    %c0_i32 = arith.constant 0 : i32
    %c0_i32_0 = arith.constant 0 : i32
    return %c0_i32, %arg0 : i32, i32
  }
  func.func @transform_3(%arg0: i32) -> (i32, i32) {
    %c0_i32 = arith.constant 0 : i32
    %c0_i32_0 = arith.constant 0 : i32
    return %c0_i32, %arg0 : i32, i32
  }
  func.func @transform_4(%arg0: i32) -> (i32, i32) {
    %c0_i32 = arith.constant 0 : i32
    %c0_i32_0 = arith.constant 0 : i32
    return %c0_i32, %arg0 : i32, i32
  }
  func.func @transform_5(%arg0: i32) -> (i32, i32, i32) {
    %c0_i32 = arith.constant 0 : i32
    %c0_i32_0 = arith.constant 0 : i32
    %c0_i32_1 = arith.constant 0 : i32
    return %arg0, %c0_i32, %c0_i32_0 : i32, i32, i32
  }
}

</mosaic_0001>

<llo_original>
// kernel: t5full_forward.1
$region0: #{t5full_forward.1}
  #allocation0 [shape = 'u32[]', space=smem, size = 0x4, offset = 0x4, fixed_abs, tag = 'smem constant byte address 0x4 - core index']
  #allocation1 [shape = 'u32[144,128]{1,0:T(1,128)}', space=vmem, size = 0x12000, scoped, tag = 'internal scratch']
  %s0 = inlined_call_operand.vmem [shape: bf16[2,128], index: 0, kind: input, shape index: {}]
  %s1 = inlined_call_operand.vmem [shape: bf16[128,256], index: 1, kind: input, shape index: {}]
  %s2 = inlined_call_operand.vmem [shape: f32[1,256], index: 2, kind: input, shape index: {}]
  %s3 = inlined_call_operand.vmem [shape: f32[1,256], index: 3, kind: input, shape index: {}]
  %s4 = inlined_call_operand.hbm [shape: f32[2,256], index: 4, kind: output, shape index: {0}]
  %s5 = inlined_call_operand.vmem [shape: f32[1,2,1], index: 5, kind: output, shape index: {1}]
  %6 = xla_tuple %s4, %s5
  %s7 = sld [smem:[#allocation0]]
  $region34: #{t5full_forward.1} parent=0
    _
  %s9 = ssub.s32 1, %s7
  %s10 = scalar_select 0, %s9, %s7
  $region1: #{t5full_forward.1} parent=0
    #allocation2 [shape = 'u8[2048]{0}', space=vmem, size = 0x800, scoped, tag = 'output window, operand 0, single buffered']
    #allocation3 [shape = 's32[1]{0}', space=sflag, size = 0x4, scoped, tag = 'scoped memory for t5full_forward.1']
    %11 = vsyncpa [#allocation3], 0
    // Predicated region
    $region2: #{t5full_forward.1} parent=1 // pred_check
      _
    $region3: #{t5full_forward.1} parent=1 // pred_check_branch
      %13 = sbr.rel (0) target = $region5
    $region4: #{t5full_forward.1} parent=1 // pred_region
      _
    $region5: #{t5full_forward.1} parent=1 // pred_fallthru
      _
    // Predicated region
    $region6: #{t5full_forward.1} parent=1 // pred_check
      _
    $region7: #{t5full_forward.1} parent=1 // pred_check_branch
      %15 = sbr.rel (0) target = $region9
    $region8: #{t5full_forward.1} parent=1 // pred_region
      _
    $region9: #{t5full_forward.1} parent=1 // pred_fallthru
      _
    // Predicated region
    $region10: #{t5full_forward.1} parent=1 // pred_check
      _
    $region11: #{t5full_forward.1} parent=1 // pred_check_branch
      %17 = sbr.rel (0) target = $region13
    $region12: #{t5full_forward.1} parent=1 // pred_region
      _
    $region13: #{t5full_forward.1} parent=1 // pred_fallthru
      _
    // Predicated region
    $region14: #{t5full_forward.1} parent=1 // pred_check
      _
    $region15: #{t5full_forward.1} parent=1 // pred_check_branch
      %19 = sbr.rel (0) target = $region17
    $region16: #{t5full_forward.1} parent=1 // pred_region
      _
    $region17: #{t5full_forward.1} parent=1 // pred_fallthru
      _
    %v21 = vld [vmem:[%s0] sm:$0x1]
    %v22 = vld [vmem:[%s1] sm:$0xff]
    %v23 = vld [vmem:[%s1 + $0x8] sm:$0xff]
    %v24 = vld [vmem:[%s1 + $0x10] sm:$0xff]
    %v25 = vld [vmem:[%s1 + $0x18] sm:$0xff]
    %v26 = vld [vmem:[%s1 + $0x20] sm:$0xff]
    %v27 = vld [vmem:[%s1 + $0x28] sm:$0xff]
    %v28 = vld [vmem:[%s1 + $0x30] sm:$0xff]
    %v29 = vld [vmem:[%s1 + $0x38] sm:$0xff]
    %v30 = vld [vmem:[%s1 + $0x40] sm:$0xff]
    %v31 = vld [vmem:[%s1 + $0x48] sm:$0xff]
    %v32 = vld [vmem:[%s1 + $0x50] sm:$0xff]
    %v33 = vld [vmem:[%s1 + $0x58] sm:$0xff]
    %v34 = vld [vmem:[%s1 + $0x60] sm:$0xff]
    %v35 = vld [vmem:[%s1 + $0x68] sm:$0xff]
    %v36 = vld [vmem:[%s1 + $0x70] sm:$0xff]
    %v37 = vld [vmem:[%s1 + $0x78] sm:$0xff]
    %v38 = vld [vmem:[%s2] sm:$0x3]
    %v40 = vlaneseq
    %v41 = vshrl.u32 %v40, 7
    %v42 = vsub.s32 0, %v41
    %v43 = vrot.slane %v38, %v42
    %v44 = vlaneseq
    %v45 = vshrl.u32 %v44, 7
    %v46 = vsub.s32 1, %v45
    %v47 = vrot.slane %v38, %v46
    %v66 = vunpack.c.l.b16 %v22
    %v67 = vunpack.c.h.b16 %v22
    %v68 = vunpack.c.l.b16 %v23
    %v69 = vunpack.c.h.b16 %v23
    %v70 = vunpack.c.l.b16 %v24
    %v71 = vunpack.c.h.b16 %v24
    %v72 = vunpack.c.l.b16 %v25
    %v73 = vunpack.c.h.b16 %v25
    %v74 = vunpack.c.l.b16 %v26
    %v75 = vunpack.c.h.b16 %v26
    %v76 = vunpack.c.l.b16 %v27
    %v77 = vunpack.c.h.b16 %v27
    %v78 = vunpack.c.l.b16 %v28
    %v79 = vunpack.c.h.b16 %v28
    %v80 = vunpack.c.l.b16 %v29
    %v81 = vunpack.c.h.b16 %v29
    %v82 = vunpack.c.l.b16 %v30
    %v83 = vunpack.c.h.b16 %v30
    %v84 = vunpack.c.l.b16 %v31
    %v85 = vunpack.c.h.b16 %v31
    %v86 = vunpack.c.l.b16 %v32
    %v87 = vunpack.c.h.b16 %v32
    %v88 = vunpack.c.l.b16 %v33
    %v89 = vunpack.c.h.b16 %v33
    %v90 = vunpack.c.l.b16 %v34
    %v91 = vunpack.c.h.b16 %v34
    %v92 = vunpack.c.l.b16 %v35
    %v93 = vunpack.c.h.b16 %v35
    %v94 = vunpack.c.l.b16 %v36
    %v95 = vunpack.c.h.b16 %v36
    %v96 = vunpack.c.l.b16 %v37
    %v97 = vunpack.c.h.b16 %v37
    %v98 = vpack.c.b16 %v68, %v66
    %v99 = vpack.c.b16 %v69, %v67
    %v100 = vpack.c.b16 %v72, %v70
    %v101 = vpack.c.b16 %v73, %v71
    %v102 = vpack.c.b16 %v76, %v74
    %v103 = vpack.c.b16 %v77, %v75
    %v104 = vpack.c.b16 %v80, %v78
    %v105 = vpack.c.b16 %v81, %v79
    %v106 = vpack.c.b16 %v84, %v82
    %v107 = vpack.c.b16 %v85, %v83
    %v108 = vpack.c.b16 %v88, %v86
    %v109 = vpack.c.b16 %v89, %v87
    %v110 = vpack.c.b16 %v92, %v90
    %v111 = vpack.c.b16 %v93, %v91
    %v112 = vpack.c.b16 %v96, %v94
    %v113 = vpack.c.b16 %v97, %v95
    %130 = vmatprep.subr.bf16.mxu0 %v99
    %131 = vmatpush1.bf16.msra.mxu0 %v98
    %132 = vmatprep.subr.bf16.mxu0 %v101
    %133 = vmatpush1.bf16.msra.mxu0 %v100
    %134 = vmatprep.subr.bf16.mxu0 %v103
    %135 = vmatpush1.bf16.msra.mxu0 %v102
    %136 = vmatprep.subr.bf16.mxu0 %v105
    %137 = vmatpush1.bf16.msra.mxu0 %v104
    %138 = vmatprep.subr.bf16.mxu0 %v107
    %139 = vmatpush1.bf16.msra.mxu0 %v106
    %140 = vmatprep.subr.bf16.mxu0 %v109
    %141 = vmatpush1.bf16.msra.mxu0 %v108
    %142 = vmatprep.subr.bf16.mxu0 %v111
    %143 = vmatpush1.bf16.msra.mxu0 %v110
    %144 = vmatprep.subr.bf16.mxu0 %v113
    %145 = vmatpush1.bf16.msra.mxu0 %v112
    %146 = vmatprep.subr.bf16.mxu0 0
    %147 = vmatpush1.bf16.msra.mxu0 0
    %148 = vmatprep.subr.bf16.mxu0 0
    %149 = vmatpush1.bf16.msra.mxu0 0
    %150 = vmatprep.subr.bf16.mxu0 0
    %151 = vmatpush1.bf16.msra.mxu0 0
    %152 = vmatprep.subr.bf16.mxu0 0
    %153 = vmatpush1.bf16.msra.mxu0 0
    %154 = vmatprep.subr.bf16.mxu0 0
    %155 = vmatpush1.bf16.msra.mxu0 0
    %156 = vmatprep.subr.bf16.mxu0 0
    %157 = vmatpush1.bf16.msra.mxu0 0
    %158 = vmatprep.subr.bf16.mxu0 0
    %159 = vmatpush1.bf16.msra.mxu0 0
    %160 = vmatprep.subr.bf16.mxu0 0
    %161 = vmatpush1.bf16.msra.mxu0 0
    %162 = vmatprep.mubr.bf16.mxu0 0
    %163 = vmatmul.mubr.bf16.gmra.mrb[0].mxu0 %v21
    %v164 = vpop.f32.mrb[0].mxu0
    %v165 = vadd.f32 %v43, %v164
    %v166 = vpop.f32.mrb[0].mxu0
    %v167 = vadd.f32 %v47, %v166
    %v168 = vpop.f32.mrb[0].mxu0
    %v169 = vpop.f32.mrb[0].mxu0
    %170 = vdwg.mxu0
    %v171 = vmax.f32 %v165, 0.0
    %v172 = vmax.f32 %v167, 0.0
    %v175 = vcombine.low %v171, %v172
    %v177 = vunpack.c.l.s4 1983009808
    %v178 = vunpack.c.0.s8 %v177
    %v179 = vlaneseq
    %v180 = vshrl.u32 %v179, 7
    %v181 = vsub.s32 %v178, %v180
    %v182 = vrot.slane %v175, %v181
    %184 = vst [vmem:[#allocation2] sm:$0xf] %v182
    %v185 = vld [vmem:[%s3] sm:$0x3]
    %v187 = vlaneseq
    %v188 = vshrl.u32 %v187, 7
    %v189 = vsub.s32 0, %v188
    %v190 = vrot.slane %v185, %v189
    %v191 = vlaneseq
    %v192 = vshrl.u32 %v191, 7
    %v193 = vsub.s32 1, %v192
    %v194 = vrot.slane %v185, %v193
    %v197 = vmul.f32 %v171, %v190
    %v198 = vmul.f32 %v172, %v194
    %vm199 = vcmask 1041408
    %v200 = vsel %vm199, %v197, 0.0
    %v201 = vsel %vm199, %v198, 0.0
    %v202 = vadd.f32 %v200, %v201
    %203 = vadd.xlane.f32.xlu0 %v202
    %v204 = vpop.xlane.xlu0 %203
    %vm205 = vcmask 1024
    %206 = vst.msk [vmem:[%s5] sm:$0x3] %vm205, %v204
    // Predicated region
    $region18: #{t5full_forward.1} parent=1 // pred_check
      _
    $region19: #{t5full_forward.1} parent=1 // pred_check_branch
      %208 = sbr.rel (0) target = $region21
    $region20: #{t5full_forward.1} parent=1 // pred_region
      %s210 = ssub.s32 64, 64
      %211 = vsyncadd [#allocation3], %s210
      %s213 = sshll.u32 [#allocation2], 4
      %s214 = int_to_ptr.vmem [resolvable:$true] %s213
      %216 = dma.vmem_to_hbm [thread:$0]  %s214, 64, %s4, [#allocation3]
    $region21: #{t5full_forward.1} parent=1 // pred_fallthru
      _
    // Predicated region
    $region22: #{t5full_forward.1} parent=1 // pred_check
      _
    $region23: #{t5full_forward.1} parent=1 // pred_check_branch
      %218 = sbr.rel (0) target = $region25
    $region24: #{t5full_forward.1} parent=1 // pred_region
      _
    $region25: #{t5full_forward.1} parent=1 // pred_fallthru
      _
    // Predicated region
    $region26: #{t5full_forward.1} parent=1 // pred_check
      _
    $region27: #{t5full_forward.1} parent=1 // pred_check_branch
      %220 = sbr.rel (0) target = $region29
    $region28: #{t5full_forward.1} parent=1 // pred_region
      %221 = dma.done [#allocation3], 64
    $region29: #{t5full_forward.1} parent=1 // pred_fallthru
      _
    // Predicated region
    $region30: #{t5full_forward.1} parent=1 // pred_check
      _
    $region31: #{t5full_forward.1} parent=1 // pred_check_branch
      %223 = sbr.rel (0) target = $region33
    $region32: #{t5full_forward.1} parent=1 // pred_region
      _
    $region33: #{t5full_forward.1} parent=1 // pred_fallthru
      _
    %224 = vsyncpa [#allocation3], 1

</llo_original>
